<compile_context>
chip_gen: v6e
topology: v6e:2x2x1
jax: 0.10.0
libtpu: 0.0.40
codegen_flags: <defaults>
</compile_context>

<pallas_src>
import functools

import jax
import jax.numpy as jnp
from jax.experimental import pallas as pl
from jax.experimental.pallas import tpu as pltpu


def _round_up(n, m):
    return ((n + m - 1) // m) * m


# ----------------------------------------------------------------------------
# Kernel
# ----------------------------------------------------------------------------
def time_model_kernel(t_ref, x_ref, w_ref, out_ref, *,
                      wd, off_bias, off_temb, off_w2, off_b2, lp):
    """Two MXU matmuls + fused bias / time-embedding / ReLU epilogue.

    t_ref   : SMEM (1,)  f32   scalar time
    x_ref   : VMEM (bm, W*D)   input rows, window slots flattened into lanes
    w_ref   : VMEM (rows, Lp)  merged parameter slab (see prepare_params)
    out_ref : VMEM (bm, Lp)    lane-dense output (cols >= D are zero)
    """
    t = t_ref[0]

    # fc1 on all W window slots at once (block-diagonal weight).  Columns
    # [W*NF, W*NF+NF) of the slab are zero here, so they only receive the
    # embedding terms added below.
    h = jnp.dot(x_ref[...], w_ref[:wd, :], preferred_element_type=jnp.float32)

    # Fused feature bias:  [b1 tiled, bemb, 0...]  +  t * [0..., wemb^T, 0...]
    h = h + w_ref[off_bias:off_bias + 1, :] + t * w_ref[off_temb:off_temb + 1, :]
    h = jnp.maximum(h, 0.0)

    # fc2 on the (implicitly concatenated) features; rows >= NF*(W+1) are zero.
    out = jnp.dot(h, w_ref[off_w2:off_w2 + lp, :],
                  preferred_element_type=jnp.float32)
    out_ref[...] = (out + w_ref[off_b2:off_b2 + 1, :]).astype(out_ref.dtype)


# ----------------------------------------------------------------------------
# One-time parameter packing (hoisted out of the forward pass)
# ----------------------------------------------------------------------------
def prepare_params(params, w, d):
    """Pack all TimeModel parameters into one lane-dense (rows, Lp) f32 slab.

    Row layout (every section starts on an 8-sublane boundary):
      [0,          wd_p)        fc1 block-diag weight  (cols [0, W*NF))
      [wd_p,       wd_p+8)      row 0: [tile(b1, W), bemb, 0...]
      [wd_p+8,     wd_p+16)     row 0: [0...,        wemb^T, 0...]   (time coef)
      [wd_p+16,    wd_p+16+Lp)  fc2 weight^T           (rows [0, NF*(W+1)), cols [0, D))
      [wd_p+16+Lp, +8)          row 0: b2
    """
    w1, b1 = params["w1"], params["b1"]          # (nf, d), (nf,)
    wemb, bemb = params["wemb"], params["bemb"]  # (nf, 1), (nf,)
    w2, b2 = params["w2"], params["b2"]          # (d, nf*(w+1)), (d,)

    nf = w1.shape[0]
    wd = w * d                     # flattened input width
    wnf = w * nf                   # window feature width
    f = wnf + nf                   # total concat feature width
    assert w2.shape == (d, f)

    lp = max(_round_up(f, 128), _round_up(d, 128))   # lane width of the slab
    wd_p = _round_up(wd, 8)

    # Static layout invariants (keeps every kernel slice a zero-copy view).
    off_bias = wd_p
    off_temb = wd_p + 8
    off_w2 = wd_p + 16
    off_b2 = wd_p + 16 + lp
    for off in (off_bias, off_temb, off_w2, off_b2):
        assert off % 8 == 0

    f32 = jnp.float32

    # fc1 as block-diagonal (x[:, i] lands in feature cols [i*nf, (i+1)*nf)).
    w1big = jnp.kron(jnp.eye(w, dtype=f32), w1.T.astype(f32))        # (wd, wnf)
    sec_w1 = jnp.zeros((wd_p, lp), f32).at[:wd, :wnf].set(w1big)

    sec_bias = jnp.zeros((8, lp), f32)
    sec_bias = sec_bias.at[0, :wnf].set(jnp.tile(b1.astype(f32), w))
    sec_bias = sec_bias.at[0, wnf:f].set(bemb.astype(f32))

    sec_temb = jnp.zeros((8, lp), f32).at[0, wnf:f].set(
        wemb.astype(f32).reshape(nf))

    sec_w2 = jnp.zeros((lp, lp), f32).at[:f, :d].set(w2.T.astype(f32))

    sec_b2 = jnp.zeros((8, lp), f32).at[0, :d].set(b2.astype(f32))

    slab = jnp.concatenate([sec_w1, sec_bias, sec_temb, sec_w2, sec_b2], axis=0)
    meta = dict(wd=wd, d=d, lp=lp, off_bias=off_bias, off_temb=off_temb,
                off_w2=off_w2, off_b2=off_b2)
    return slab, meta


# ----------------------------------------------------------------------------
# Forward pass: one pallas_call, no per-call parameter reshuffling
# ----------------------------------------------------------------------------
def time_model_forward(x, time_scalar, w_slab, meta, *,
                       block_rows=256, trim_output=True):
    B, W, D = x.shape
    wd, lp = meta["wd"], meta["lp"]
    assert wd == W * D and D == meta["d"]

    x2d = x.reshape(B, wd).astype(jnp.float32)           # free view
    t = jnp.asarray(time_scalar, jnp.float32).reshape(1)  # scalar -> SMEM

    bm = min(_round_up(B, 8), block_rows)                 # row block
    grid = (pl.cdiv(B, bm),)

    kernel = functools.partial(
        time_model_kernel, wd=wd, off_bias=meta["off_bias"],
        off_temb=meta["off_temb"], off_w2=meta["off_w2"],
        off_b2=meta["off_b2"], lp=lp)

    out_p = pl.pallas_call(
        kernel,
        out_shape=jax.ShapeDtypeStruct((B, lp), jnp.float32),
        grid=grid,
        in_specs=[
            pl.BlockSpec(memory_space=pltpu.MemorySpace.SMEM),   # time scalar
            pl.BlockSpec((bm, wd), lambda i: (i, 0)),            # x row block
            pl.BlockSpec(w_slab.shape, lambda i: (0, 0)),        # resident slab
        ],
        out_specs=pl.BlockSpec((bm, lp), lambda i: (i, 0)),
        compiler_params=pltpu.CompilerParams(
            dimension_semantics=("parallel",)),
    )(t, x2d, w_slab)

    # Consumers that can accept the lane-padded (B, Lp) output should pass
    # trim_output=False to skip this extra slice HLO.
    return out_p[:, :D] if trim_output else out_p


# ----------------------------------------------------------------------------
# Pure-JAX reference (mirrors the PyTorch forward exactly)
# ----------------------------------------------------------------------------
def time_model_reference(x, time_scalar, params):
    B, W, D = x.shape
    w1, b1, wemb, bemb, w2, b2 = (params["w1"], params["b1"], params["wemb"],
                                  params["bemb"], params["w2"], params["b2"])
    t = jnp.full((B, 1), time_scalar, dtype=jnp.float32)
    embs = t @ wemb.T + bemb                                           # (B, NF)
    fts = jnp.concatenate(
        [x[:, i] @ w1.T + b1 for i in range(W)] + [embs], axis=1)
    return jax.nn.relu(fts) @ w2.T + b2                                # (B, D)


def make_params(key, d, w, nf):
    ks = jax.random.split(key, 6)
    scale = 0.1
    return {
        "w1":   scale * jax.random.normal(ks[0], (nf, d), jnp.float32),
        "b1":   scale * jax.random.normal(ks[1], (nf,), jnp.float32),
        "wemb": scale * jax.random.normal(ks[2], (nf, 1), jnp.float32),
        "bemb": scale * jax.random.normal(ks[3], (nf,), jnp.float32),
        "w2":   scale * jax.random.normal(ks[4], (d, nf * (w + 1)), jnp.float32),
        "b2":   scale * jax.random.normal(ks[5], (d,), jnp.float32),
    }


if __name__ == "__main__":
    # d=32 features, w=3 window slots, nf=16 hidden, batch=8.
    B, W, D, NF = 8, 3, 32, 16

    key = jax.random.PRNGKey(0)
    k_x, k_p = jax.random.split(key)
    x = jax.random.normal(k_x, (B, W, D), jnp.float32)
    time_scalar = jnp.float32(0.5)
    params = make_params(k_p, D, W, NF)

    # One-time packing (would be done once at model-init time in real use).
    w_slab, meta = prepare_params(params, W, D)
    w_slab = jax.block_until_ready(w_slab)

    out = time_model_forward(x, time_scalar, w_slab, meta)
    out = jax.block_until_ready(out)

    ref = time_model_reference(x, time_scalar, params)
    assert out.shape == (B, D)
    assert jnp.allclose(out, ref, atol=1e-4, rtol=1e-4), "mismatch vs reference"

    print("KERNEL_OK")
</pallas_src>

<mosaic_0001>
module attributes {stable_mosaic.version = 11 : i64} {
  func.func @time_model_kernel(%arg0: i32, %arg1: memref<1xf32, #tpu.memory_space<smem>>, %arg2: memref<8x96xf32, #tpu.memory_space<vmem>>, %arg3: memref<248x128xf32, #tpu.memory_space<vmem>>, %arg4: memref<8x128xf32, #tpu.memory_space<vmem>>) attributes {dimension_semantics = [#tpu.dimension_semantics<parallel>], iteration_bounds = array<i64: 1>, scalar_prefetch = 0 : i64, scratch_operands = 0 : i64, tpu.core_type = #tpu.core_type<tc>, window_params = [{transform_indices = @transform_0, window_bounds = array<i64: 1>}, {transform_indices = @transform_1, window_bounds = array<i64: 8, 96>}, {pipeline_mode = #tpu.pipeline_mode<synchronous>, transform_indices = @transform_2, window_bounds = array<i64: 248, 128>}, {transform_indices = @transform_3, window_bounds = array<i64: 8, 128>}]} {
    %c0 = arith.constant 0 : index
    %0 = memref.load %arg1[%c0] : memref<1xf32, #tpu.memory_space<smem>>
    %c0_0 = arith.constant 0 : index
    %c0_1 = arith.constant 0 : index
    %1 = vector.load %arg2[%c0_0, %c0_1] : memref<8x96xf32, #tpu.memory_space<vmem>>, vector<8x96xf32>
    %c0_2 = arith.constant 0 : index
    %c0_3 = arith.constant 0 : index
    %2 = vector.load %arg3[%c0_2, %c0_3] : memref<248x128xf32, #tpu.memory_space<vmem>>, vector<96x128xf32>
    %cst = arith.constant dense<0.000000e+00> : vector<8x128xf32>
    %3 = tpu.matmul %1, %2, %cst {dimension_numbers = #tpu.dot_dimension_numbers<[1], [0], [0], [1], [0, 0, 1, 1], [], []>} : vector<8x96xf32>, vector<96x128xf32>, vector<8x128xf32> -> vector<8x128xf32>
    %c96 = arith.constant 96 : index
    %c0_4 = arith.constant 0 : index
    %4 = vector.load %arg3[%c96, %c0_4] : memref<248x128xf32, #tpu.memory_space<vmem>>, vector<1x128xf32>
    %5 = vector.broadcast %4 : vector<1x128xf32> to vector<8x128xf32>
    %6 = arith.addf %3, %5 : vector<8x128xf32>
    %c104 = arith.constant 104 : index
    %c0_5 = arith.constant 0 : index
    %7 = vector.load %arg3[%c104, %c0_5] : memref<248x128xf32, #tpu.memory_space<vmem>>, vector<1x128xf32>
    %8 = vector.broadcast %0 : f32 to vector<1x128xf32>
    %9 = arith.mulf %8, %7 : vector<1x128xf32>
    %10 = vector.broadcast %9 : vector<1x128xf32> to vector<8x128xf32>
    %11 = arith.addf %6, %10 : vector<8x128xf32>
    %cst_6 = arith.constant 0.000000e+00 : f32
    %12 = vector.broadcast %cst_6 : f32 to vector<8x128xf32>
    %13 = arith.maximumf %11, %12 : vector<8x128xf32>
    %c112 = arith.constant 112 : index
    %c0_7 = arith.constant 0 : index
    %14 = vector.load %arg3[%c112, %c0_7] : memref<248x128xf32, #tpu.memory_space<vmem>>, vector<128x128xf32>
    %cst_8 = arith.constant dense<0.000000e+00> : vector<8x128xf32>
    %15 = tpu.matmul %13, %14, %cst_8 {dimension_numbers = #tpu.dot_dimension_numbers<[1], [0], [0], [1], [0, 0, 1, 1], [], []>} : vector<8x128xf32>, vector<128x128xf32>, vector<8x128xf32> -> vector<8x128xf32>
    %c240 = arith.constant 240 : index
    %c0_9 = arith.constant 0 : index
    %16 = vector.load %arg3[%c240, %c0_9] : memref<248x128xf32, #tpu.memory_space<vmem>>, vector<1x128xf32>
    %17 = vector.broadcast %16 : vector<1x128xf32> to vector<8x128xf32>
    %18 = arith.addf %15, %17 : vector<8x128xf32>
    %c0_10 = arith.constant 0 : index
    %c0_11 = arith.constant 0 : index
    %19 = vector.load %arg4[%c0_10, %c0_11] : memref<8x128xf32, #tpu.memory_space<vmem>>, vector<8x128xf32>
    tpu.vector_store %arg4[%c0_10, %c0_11], %18 {strides = array<i32>} : memref<8x128xf32, #tpu.memory_space<vmem>>, vector<8x128xf32>,
    return
  }
  func.func @transform_0(%arg0: i32) -> i32 {
    %c0_i32 = arith.constant 0 : i32
    %c0_i32_0 = arith.constant 0 : i32
    return %c0_i32 : i32
  }
  func.func @transform_1(%arg0: i32) -> (i32, i32) {
    %c0_i32 = arith.constant 0 : i32
    %c0_i32_0 = arith.constant 0 : i32
    return %arg0, %c0_i32 : i32, i32
  }
  func.func @transform_2(%arg0: i32) -> (i32, i32) {
    %c0_i32 = arith.constant 0 : i32
    %c0_i32_0 = arith.constant 0 : i32
    %c0_i32_1 = arith.constant 0 : i32
    return %c0_i32, %c0_i32_0 : i32, i32
  }
  func.func @transform_3(%arg0: i32) -> (i32, i32) {
    %c0_i32 = arith.constant 0 : i32
    %c0_i32_0 = arith.constant 0 : i32
    return %arg0, %c0_i32 : i32, i32
  }
}

</mosaic_0001>

<llo_original>
// kernel: tpu_custom_call.1
$region0: #{tpu_custom_call.1}
  #allocation0 [shape = 'u32[]', space=smem, size = 0x4, offset = 0x4, fixed_abs, tag = 'smem constant byte address 0x4 - core index']
  #allocation1 [shape = 'u32[144,128]{1,0:T(1,128)}', space=vmem, size = 0x12000, scoped, tag = 'internal scratch']
  #allocation2 [shape = 'f32[1]{0:T(128)S(6)}', space=smem, size = 0x200, scoped, tag = 'scoped memory for tpu_custom_call.1']
  %s0 = inlined_call_operand.<no memory space> [shape: f32[1], index: 0, kind: input, shape index: {}]
  %s1 = inlined_call_operand.hbm [shape: f32[8,96], index: 1, kind: input, shape index: {}]
  %s2 = inlined_call_operand.hbm [shape: f32[248,128], index: 2, kind: input, shape index: {}]
  %s3 = inlined_call_operand.hbm [shape: f32[8,128], index: 3, kind: output, shape index: {}]
  %s4 = sld [smem:[#allocation0]]
  $region30: #{tpu_custom_call.1} parent=0
    _
  %s6 = ssub.s32 1, %s4
  %s7 = scalar_select 0, %s6, %s4
  %8 = sst [smem:[#allocation2]] %s0
  $region1: #{tpu_custom_call.1} parent=0
    #allocation3 [shape = 'u8[4096]{0}', space=vmem, size = 0x1000, scoped, tag = 'input window, operand 1, single buffered']
    #allocation4 [shape = 's32[1]{0}', space=sflag, size = 0x4, scoped, tag = 'scoped memory for tpu_custom_call.1']
    #allocation5 [shape = 's32[1]{0}', space=sflag, size = 0x4, scoped, tag = 'scoped memory for tpu_custom_call.1']
    #allocation6 [shape = 'u8[126976]{0}', space=vmem, size = 0x1f000, scoped, tag = 'input window, operand 2, single buffered']
    #allocation7 [shape = 's32[1]{0}', space=sflag, size = 0x4, scoped, tag = 'scoped memory for tpu_custom_call.1']
    #allocation8 [shape = 'u8[4096]{0}', space=vmem, size = 0x1000, scoped, tag = 'output window, operand 0, single buffered']
    %9 = vsyncpa [#allocation4], 0
    %10 = vsyncpa [#allocation7], 0
    %11 = vsyncpa [#allocation5], 0
    // Predicated region
    $region2: #{tpu_custom_call.1} parent=1 // pred_check
      _
    $region3: #{tpu_custom_call.1} parent=1 // pred_check_branch
      %13 = sbr.rel (0) target = $region5
    $region4: #{tpu_custom_call.1} parent=1 // pred_region
      _
    $region5: #{tpu_custom_call.1} parent=1 // pred_fallthru
      _
    // Predicated region
    $region6: #{tpu_custom_call.1} parent=1 // pred_check
      _
    $region7: #{tpu_custom_call.1} parent=1 // pred_check_branch
      %15 = sbr.rel (0) target = $region9
    $region8: #{tpu_custom_call.1} parent=1 // pred_region
      %s17 = ssub.s32 128, 128
      %18 = vsyncadd [#allocation4], %s17
      %s20 = sshll.u32 [#allocation3], 4
      %s21 = int_to_ptr.vmem [resolvable:$true] %s20
      %23 = dma.hbm_to_vmem [thread:$0]  %s1, 128, %s21, [#allocation4]
    $region9: #{tpu_custom_call.1} parent=1 // pred_fallthru
      _
    // Predicated region
    $region10: #{tpu_custom_call.1} parent=1 // pred_check
      _
    $region11: #{tpu_custom_call.1} parent=1 // pred_check_branch
      %25 = sbr.rel (0) target = $region13
    $region12: #{tpu_custom_call.1} parent=1 // pred_region
      %s27 = ssub.s32 3968, 3968
      %28 = vsyncadd [#allocation7], %s27
      %s29 = sshll.u32 [#allocation6], 4
      %s30 = int_to_ptr.vmem [resolvable:$true] %s29
      %35 = dma.hbm_to_vmem [thread:$0]  %s2, 3968, %s30, [#allocation7], 128, 128, 8
    $region13: #{tpu_custom_call.1} parent=1 // pred_fallthru
      _
    // Predicated region
    $region14: #{tpu_custom_call.1} parent=1 // pred_check
      _
    $region15: #{tpu_custom_call.1} parent=1 // pred_check_branch
      %37 = sbr.rel (0) target = $region17
    $region16: #{tpu_custom_call.1} parent=1 // pred_region
      %38 = dma.done [#allocation4], 128
    $region17: #{tpu_custom_call.1} parent=1 // pred_fallthru
      _
    // Predicated region
    $region18: #{tpu_custom_call.1} parent=1 // pred_check
      _
    $region19: #{tpu_custom_call.1} parent=1 // pred_check_branch
      %40 = sbr.rel (0) target = $region21
    $region20: #{tpu_custom_call.1} parent=1 // pred_region
      %41 = dma.done [#allocation7], 3968
    $region21: #{tpu_custom_call.1} parent=1 // pred_fallthru
      _
    %s42 = sld [smem:[#allocation2]]
    %v43 = vld [vmem:[#allocation3] sm:$0xff]
    %v44 = vld [vmem:[#allocation6] sm:$0xff]
    %v45 = vld [vmem:[#allocation6 + $0x8] sm:$0xff]
    %v46 = vld [vmem:[#allocation6 + $0x10] sm:$0xff]
    %v47 = vld [vmem:[#allocation6 + $0x18] sm:$0xff]
    %v48 = vld [vmem:[#allocation6 + $0x20] sm:$0xff]
    %v49 = vld [vmem:[#allocation6 + $0x28] sm:$0xff]
    %v50 = vld [vmem:[#allocation6 + $0x30] sm:$0xff]
    %v51 = vld [vmem:[#allocation6 + $0x38] sm:$0xff]
    %v52 = vld [vmem:[#allocation6 + $0x40] sm:$0xff]
    %v53 = vld [vmem:[#allocation6 + $0x48] sm:$0xff]
    %v54 = vld [vmem:[#allocation6 + $0x50] sm:$0xff]
    %v55 = vld [vmem:[#allocation6 + $0x58] sm:$0xff]
    %v56 = vld [vmem:[#allocation6 + $0x60] sm:$0x1]
    %v57 = vlaneseq
    %v58 = vshrl.u32 %v57, 7
    %v59 = vsub.s32 0, %v58
    %v60 = vrot.slane %v56, %v59
    %vm61 = vcmask 785408
    %v63 = vsel %vm61, %v43, 0
    %65 = vmatprep.subr.mxu0 0.0
    %66 = vmatpush1.msra.mxu0 0.0
    %67 = vmatprep.subr.mxu0 0.0
    %68 = vmatpush1.msra.mxu0 0.0
    %69 = vmatprep.subr.mxu0 0.0
    %70 = vmatpush1.msra.mxu0 0.0
    %71 = vmatprep.subr.mxu0 0.0
    %72 = vmatpush1.msra.mxu0 0.0
    %73 = vmatprep.subr.mxu0 0.0
    %74 = vmatpush1.msra.mxu0 %v55
    %75 = vmatprep.subr.mxu0 0.0
    %76 = vmatpush1.msra.mxu0 %v54
    %77 = vmatprep.subr.mxu0 0.0
    %78 = vmatpush1.msra.mxu0 %v53
    %79 = vmatprep.subr.mxu0 0.0
    %80 = vmatpush1.msra.mxu0 %v52
    %81 = vmatprep.subr.mxu0 0.0
    %82 = vmatpush1.msra.mxu0 %v51
    %83 = vmatprep.subr.mxu0 0.0
    %84 = vmatpush1.msra.mxu0 %v50
    %85 = vmatprep.subr.mxu0 0.0
    %86 = vmatpush1.msra.mxu0 %v49
    %87 = vmatprep.subr.mxu0 0.0
    %88 = vmatpush1.msra.mxu0 %v48
    %89 = vmatprep.subr.mxu0 0.0
    %90 = vmatpush1.msra.mxu0 %v47
    %91 = vmatprep.subr.mxu0 0.0
    %92 = vmatpush1.msra.mxu0 %v46
    %93 = vmatprep.subr.mxu0 0.0
    %94 = vmatpush1.msra.mxu0 %v45
    %95 = vmatprep.subr.mxu0 0.0
    %96 = vmatpush1.msra.mxu0 %v44
    %97 = vmatprep.subr.mxu0 0.0
    %98 = vmatpush2.msra.mxu0 0.0
    %99 = vmatprep.subr.mxu0 0.0
    %100 = vmatpush2.msra.mxu0 0.0
    %101 = vmatprep.subr.mxu0 0.0
    %102 = vmatpush2.msra.mxu0 0.0
    %103 = vmatprep.subr.mxu0 0.0
    %104 = vmatpush2.msra.mxu0 0.0
    %105 = vmatprep.subr.mxu0 0.0
    %106 = vmatpush2.msra.mxu0 0.0
    %107 = vmatprep.subr.mxu0 0.0
    %108 = vmatpush2.msra.mxu0 0.0
    %109 = vmatprep.subr.mxu0 0.0
    %110 = vmatpush2.msra.mxu0 0.0
    %111 = vmatprep.subr.mxu0 0.0
    %112 = vmatpush2.msra.mxu0 0.0
    %113 = vmatprep.subr.mxu0 0.0
    %114 = vmatpush2.msra.mxu0 0.0
    %115 = vmatprep.subr.mxu0 0.0
    %116 = vmatpush2.msra.mxu0 0.0
    %117 = vmatprep.subr.mxu0 0.0
    %118 = vmatpush2.msra.mxu0 0.0
    %119 = vmatprep.subr.mxu0 0.0
    %120 = vmatpush2.msra.mxu0 0.0
    %121 = vmatprep.subr.mxu0 0.0
    %122 = vmatpush2.msra.mxu0 0.0
    %123 = vmatprep.subr.mxu0 0.0
    %124 = vmatpush2.msra.mxu0 0.0
    %125 = vmatprep.subr.mxu0 0.0
    %126 = vmatpush2.msra.mxu0 0.0
    %127 = vmatprep.subr.mxu0 0.0
    %128 = vmatpush2.msra.mxu0 0.0
    %129 = vmatprep.mubr.f32.mxu0 0.0
    %130 = vmatmul.mubr.f32.gmra.mxu0 %v63
    %v131 = vpop.f32.mrf.mxu0
    %v132 = vadd.f32 %v60, %v131
    %v133 = vpop.f32.mrf.mxu0
    %134 = vdwg.mxu0
    %v135 = vld [vmem:[#allocation6 + $0x68] sm:$0x1]
    %v136 = vstv %s42
    %v137 = vmul.f32 %v136, %v135
    %v138 = vlaneseq
    %v139 = vshrl.u32 %v138, 7
    %v140 = vsub.s32 0, %v139
    %v141 = vrot.slane %v137, %v140
    %v142 = vadd.f32 %v132, %v141
    %v143 = vmax.f32 %v142, 0.0
    %v144 = vld [vmem:[#allocation6 + $0x70] sm:$0xff]
    %v145 = vld [vmem:[#allocation6 + $0x78] sm:$0xff]
    %v146 = vld [vmem:[#allocation6 + $0x80] sm:$0xff]
    %v147 = vld [vmem:[#allocation6 + $0x88] sm:$0xff]
    %v148 = vld [vmem:[#allocation6 + $0x90] sm:$0xff]
    %v149 = vld [vmem:[#allocation6 + $0x98] sm:$0xff]
    %v150 = vld [vmem:[#allocation6 + $0xa0] sm:$0xff]
    %v151 = vld [vmem:[#allocation6 + $0xa8] sm:$0xff]
    %v152 = vld [vmem:[#allocation6 + $0xb0] sm:$0xff]
    %v153 = vld [vmem:[#allocation6 + $0xb8] sm:$0xff]
    %v154 = vld [vmem:[#allocation6 + $0xc0] sm:$0xff]
    %v155 = vld [vmem:[#allocation6 + $0xc8] sm:$0xff]
    %v156 = vld [vmem:[#allocation6 + $0xd0] sm:$0xff]
    %v157 = vld [vmem:[#allocation6 + $0xd8] sm:$0xff]
    %v158 = vld [vmem:[#allocation6 + $0xe0] sm:$0xff]
    %v159 = vld [vmem:[#allocation6 + $0xe8] sm:$0xff]
    %v160 = vld [vmem:[#allocation6 + $0xf0] sm:$0x1]
    %v161 = vlaneseq
    %v162 = vshrl.u32 %v161, 7
    %v163 = vsub.s32 0, %v162
    %v164 = vrot.slane %v160, %v163
    %165 = vmatprep.subr.mxu0 0.0
    %166 = vmatpush1.msra.mxu0 %v159
    %167 = vmatprep.subr.mxu0 0.0
    %168 = vmatpush1.msra.mxu0 %v158
    %169 = vmatprep.subr.mxu0 0.0
    %170 = vmatpush1.msra.mxu0 %v157
    %171 = vmatprep.subr.mxu0 0.0
    %172 = vmatpush1.msra.mxu0 %v156
    %173 = vmatprep.subr.mxu0 0.0
    %174 = vmatpush1.msra.mxu0 %v155
    %175 = vmatprep.subr.mxu0 0.0
    %176 = vmatpush1.msra.mxu0 %v154
    %177 = vmatprep.subr.mxu0 0.0
    %178 = vmatpush1.msra.mxu0 %v153
    %179 = vmatprep.subr.mxu0 0.0
    %180 = vmatpush1.msra.mxu0 %v152
    %181 = vmatprep.subr.mxu0 0.0
    %182 = vmatpush1.msra.mxu0 %v151
    %183 = vmatprep.subr.mxu0 0.0
    %184 = vmatpush1.msra.mxu0 %v150
    %185 = vmatprep.subr.mxu0 0.0
    %186 = vmatpush1.msra.mxu0 %v149
    %187 = vmatprep.subr.mxu0 0.0
    %188 = vmatpush1.msra.mxu0 %v148
    %189 = vmatprep.subr.mxu0 0.0
    %190 = vmatpush1.msra.mxu0 %v147
    %191 = vmatprep.subr.mxu0 0.0
    %192 = vmatpush1.msra.mxu0 %v146
    %193 = vmatprep.subr.mxu0 0.0
    %194 = vmatpush1.msra.mxu0 %v145
    %195 = vmatprep.subr.mxu0 0.0
    %196 = vmatpush1.msra.mxu0 %v144
    %197 = vmatprep.subr.mxu0 0.0
    %198 = vmatpush2.msra.mxu0 0.0
    %199 = vmatprep.subr.mxu0 0.0
    %200 = vmatpush2.msra.mxu0 0.0
    %201 = vmatprep.subr.mxu0 0.0
    %202 = vmatpush2.msra.mxu0 0.0
    %203 = vmatprep.subr.mxu0 0.0
    %204 = vmatpush2.msra.mxu0 0.0
    %205 = vmatprep.subr.mxu0 0.0
    %206 = vmatpush2.msra.mxu0 0.0
    %207 = vmatprep.subr.mxu0 0.0
    %208 = vmatpush2.msra.mxu0 0.0
    %209 = vmatprep.subr.mxu0 0.0
    %210 = vmatpush2.msra.mxu0 0.0
    %211 = vmatprep.subr.mxu0 0.0
    %212 = vmatpush2.msra.mxu0 0.0
    %213 = vmatprep.subr.mxu0 0.0
    %214 = vmatpush2.msra.mxu0 0.0
    %215 = vmatprep.subr.mxu0 0.0
    %216 = vmatpush2.msra.mxu0 0.0
    %217 = vmatprep.subr.mxu0 0.0
    %218 = vmatpush2.msra.mxu0 0.0
    %219 = vmatprep.subr.mxu0 0.0
    %220 = vmatpush2.msra.mxu0 0.0
    %221 = vmatprep.subr.mxu0 0.0
    %222 = vmatpush2.msra.mxu0 0.0
    %223 = vmatprep.subr.mxu0 0.0
    %224 = vmatpush2.msra.mxu0 0.0
    %225 = vmatprep.subr.mxu0 0.0
    %226 = vmatpush2.msra.mxu0 0.0
    %227 = vmatprep.subr.mxu0 0.0
    %228 = vmatpush2.msra.mxu0 0.0
    %229 = vmatprep.mubr.f32.mxu0 0.0
    %230 = vmatmul.mubr.f32.gmra.mxu0 %v143
    %v231 = vpop.f32.mrf.mxu0
    %v232 = vadd.f32 %v164, %v231
    %v233 = vpop.f32.mrf.mxu0
    %234 = vdwg.mxu0
    %235 = vst [vmem:[#allocation8] sm:$0xff] %v232
    // Predicated region
    $region22: #{tpu_custom_call.1} parent=1 // pred_check
      _
    $region23: #{tpu_custom_call.1} parent=1 // pred_check_branch
      %237 = sbr.rel (0) target = $region25
    $region24: #{tpu_custom_call.1} parent=1 // pred_region
      %s239 = ssub.s32 128, 128
      %240 = vsyncadd [#allocation5], %s239
      %s242 = sshll.u32 [#allocation8], 4
      %s243 = int_to_ptr.vmem [resolvable:$true] %s242
      %245 = dma.vmem_to_hbm [thread:$0]  %s243, 128, %s3, [#allocation5]
    $region25: #{tpu_custom_call.1} parent=1 // pred_fallthru
      _
    // Predicated region
    $region26: #{tpu_custom_call.1} parent=1 // pred_check
      _
    $region27: #{tpu_custom_call.1} parent=1 // pred_check_branch
      %247 = sbr.rel (0) target = $region29
    $region28: #{tpu_custom_call.1} parent=1 // pred_region
      %248 = dma.done [#allocation5], 128
    $region29: #{tpu_custom_call.1} parent=1 // pred_fallthru
      _
    %249 = vsyncpa [#allocation4], 1
    %250 = vsyncpa [#allocation7], 1
    %251 = vsyncpa [#allocation5], 1

</llo_original>
